<compile_context>
chip_gen: v6e
topology: v6e:2x2x1
jax: 0.10.0
libtpu: 0.0.40
codegen_flags: <defaults>
</compile_context>

<pallas_src>
import math

import jax
import jax.numpy as jnp
from jax.experimental import pallas as pl
from jax.experimental.pallas import tpu as pltpu


_LANE = 128            # lane quantum (last dim)
_SUBLANE = 8           # sublane quantum (second-to-last dim)
_MIN_ROWS_PER_STEP = 128


def _round_up(a, b):
    return ((a + b - 1) // b) * b


# ----------------------------------------------------------------------------
# fused kernel: y = relu(x @ W1 + b1) @ W2 + b2     (dropout = identity, eval)
# ----------------------------------------------------------------------------
def _status_head_kernel(x_ref, w1_ref, b1_ref, w2_ref, b2_ref, o_ref):
    # Cast the streamed activation tile to bf16 in-register: both dots become
    # single-pass bf16 MXU ops with f32 accumulators.
    x = x_ref[...].astype(jnp.bfloat16)                                 # (tm, in_dim)
    h = jnp.dot(x, w1_ref[...], preferred_element_type=jnp.float32)    # (tm, hidden) f32
    h = jnp.maximum(h + b1_ref[...], 0.0)                               # bias + ReLU in f32
    # TODO(synk): nn.Dropout is identity in eval mode; the train-time Bernoulli
    # mask (pltpu.prng_seed + pltpu.stateful_bernoulli, scaled by 1/(1-p)) is omitted.
    y = jnp.dot(h.astype(jnp.bfloat16), w2_ref[...],
                preferred_element_type=jnp.float32)                     # (tm, status)
    # TODO(synk): status_size=5 forces masked stores into a 128-lane-padded tile;
    # fuse the downstream consumer (loss/argmax) here if this ever becomes store-bound.
    o_ref[...] = y + b2_ref[...]


# ----------------------------------------------------------------------------
# one-time parameter preparation: pad hidden to the 128-lane quantum, bf16 weights
# ----------------------------------------------------------------------------
def prepare_params(w1, b1, w2, b2, *, lane=_LANE):
    """Pad the hidden dim (100 -> 128) with zeros (numerically identity) and cast
    the weight matrices to bf16.  Biases stay f32.  Call once at setup."""
    hidden = w1.shape[1]
    hp = _round_up(hidden, lane)
    if hp != hidden:
        w1 = jnp.pad(w1, ((0, 0), (0, hp - hidden)))
        b1 = jnp.pad(b1, ((0, hp - hidden),))
        w2 = jnp.pad(w2, ((0, hp - hidden), (0, 0)))
    return (w1.astype(jnp.bfloat16), b1.astype(jnp.float32),
            w2.astype(jnp.bfloat16), b2.astype(jnp.float32))


# ----------------------------------------------------------------------------
# wrapper
# ----------------------------------------------------------------------------
def output_layer_status(x, w1, b1, w2, b2, *, row_tile=1024):
    """x: (..., input_dim) -> (..., status_size).  Fused fc1 + ReLU + fc2.

    Expects params from prepare_params() (hidden padded to 128, bf16 weights).
    x may be f32 or bf16; the kernel casts the tile in-register for the MXU.
    """
    orig_shape = x.shape
    in_dim = orig_shape[-1]
    hidden = w1.shape[1]
    status_size = w2.shape[1]

    m = int(math.prod(orig_shape[:-1]))
    x2d = x.reshape(m, in_dim)                      # view; no extra HBM pass

    # Row tile: as large as row_tile (amortizes ~0.35 us/grid-step and keeps DMA
    # tiles efficient) but split into >= 2 steps for medium/large m so v7x's
    # second TensorCore gets work via the "parallel" grid axis.
    row_tile = max(_SUBLANE, _round_up(row_tile, _SUBLANE))
    if m > 2 * _MIN_ROWS_PER_STEP:
        tm = min(row_tile, _round_up(pl.cdiv(m, 2), _SUBLANE))
    else:
        tm = min(row_tile, _round_up(max(m, 1), _SUBLANE))
    grid = (pl.cdiv(m, tm),)    # ragged last block: OOB reads unused, OOB writes masked

    out = pl.pallas_call(
        _status_head_kernel,
        out_shape=jax.ShapeDtypeStruct((m, status_size), jnp.float32),
        grid=grid,
        in_specs=[
            pl.BlockSpec((tm, in_dim), lambda i: (i, 0)),              # activations (streamed)
            pl.BlockSpec((in_dim, hidden), lambda i: (0, 0)),          # W1 (VMEM-resident)
            pl.BlockSpec((1, hidden), lambda i: (0, 0)),               # b1
            pl.BlockSpec((hidden, status_size), lambda i: (0, 0)),     # W2 (VMEM-resident)
            pl.BlockSpec((1, status_size), lambda i: (0, 0)),          # b2
        ],
        out_specs=pl.BlockSpec((tm, status_size), lambda i: (i, 0)),
        compiler_params=pltpu.CompilerParams(
            dimension_semantics=("parallel",)),
    )(x2d, w1, b1.reshape(1, hidden), w2, b2.reshape(1, status_size))

    return out.reshape(*orig_shape[:-1], status_size)


# ----------------------------------------------------------------------------
# parameter init (PyTorch nn.Linear default: U(-1/sqrt(fan_in), 1/sqrt(fan_in)))
# ----------------------------------------------------------------------------
def init_params(key, input_dim, status_size, hidden=100):
    k1, k2, k3, k4 = jax.random.split(key, 4)
    bound1 = 1.0 / math.sqrt(input_dim)
    bound2 = 1.0 / math.sqrt(hidden)
    return {
        "w1": jax.random.uniform(k1, (input_dim, hidden), jnp.float32, -bound1, bound1),
        "b1": jax.random.uniform(k2, (hidden,), jnp.float32, -bound1, bound1),
        "w2": jax.random.uniform(k3, (hidden, status_size), jnp.float32, -bound2, bound2),
        "b2": jax.random.uniform(k4, (status_size,), jnp.float32, -bound2, bound2),
    }


def reference_forward_f32(x, w1, b1, w2, b2):
    """Original all-f32 PyTorch semantics (eval-mode dropout = identity)."""
    h = jax.nn.relu(x @ w1 + b1)
    return h @ w2 + b2


def reference_forward_quantized(x, w1p, b1p, w2p, b2p):
    """Pure-JAX model of the kernel's bf16-input / f32-accumulate arithmetic."""
    xb = x.astype(jnp.bfloat16).astype(jnp.float32)
    h = jnp.maximum(xb @ w1p.astype(jnp.float32) + b1p, 0.0)
    hb = h.astype(jnp.bfloat16).astype(jnp.float32)
    return hb @ w2p.astype(jnp.float32) + b2p


# ----------------------------------------------------------------------------
# driver
# ----------------------------------------------------------------------------
if __name__ == "__main__":
    # Shapes consistent with the parent NER model: encoded_inputs is
    # (batch, seq, 2*hidden + embedding_dim + tag_size) = (2, 8, 103),
    # status_size = 5.
    B, S = 2, 8
    input_dim = 2 * 32 + 32 + 7   # 103
    status_size = 5

    root = jax.random.PRNGKey(0)
    k_params, k_x = jax.random.split(root)

    raw = init_params(k_params, input_dim, status_size)          # f32, hidden=100
    w1p, b1p, w2p, b2p = prepare_params(raw["w1"], raw["b1"], raw["w2"], raw["b2"])

    x = jax.random.normal(k_x, (B, S, input_dim), jnp.float32)

    fwd = jax.jit(output_layer_status)
    y = jax.block_until_ready(fwd(x, w1p, b1p, w2p, b2p))

    # Exact check of the kernel math (same bf16 quantization, f32 accumulation).
    y_q = reference_forward_quantized(x, w1p, b1p, w2p, b2p)
    # Fidelity check against the original all-f32 module semantics.
    y_f32 = reference_forward_f32(x, raw["w1"], raw["b1"], raw["w2"], raw["b2"])

    assert y.shape == (B, S, status_size), y.shape
    assert bool(jnp.all(jnp.isfinite(y)))
    assert bool(jnp.allclose(y, y_q, rtol=2e-3, atol=2e-3)), (
        float(jnp.max(jnp.abs(y - y_q))))
    assert bool(jnp.allclose(y, y_f32, rtol=5e-2, atol=5e-2)), (
        float(jnp.max(jnp.abs(y - y_f32))))
    print("KERNEL_OK")
</pallas_src>

<mosaic_0001>
module attributes {stable_mosaic.version = 11 : i64} {
  func.func @_status_head_kernel(%arg0: i32, %arg1: memref<16x103xf32, #tpu.memory_space<vmem>>, %arg2: memref<103x128xbf16, #tpu.memory_space<vmem>>, %arg3: memref<1x128xf32, #tpu.memory_space<vmem>>, %arg4: memref<128x5xbf16, #tpu.memory_space<vmem>>, %arg5: memref<1x5xf32, #tpu.memory_space<vmem>>, %arg6: memref<16x5xf32, #tpu.memory_space<vmem>>) attributes {dimension_semantics = [#tpu.dimension_semantics<parallel>], iteration_bounds = array<i64: 1>, scalar_prefetch = 0 : i64, scratch_operands = 0 : i64, tpu.core_type = #tpu.core_type<tc>, window_params = [{transform_indices = @transform_0, window_bounds = array<i64: 16, 103>}, {pipeline_mode = #tpu.pipeline_mode<synchronous>, transform_indices = @transform_1, window_bounds = array<i64: 103, 128>}, {pipeline_mode = #tpu.pipeline_mode<synchronous>, transform_indices = @transform_2, window_bounds = array<i64: 1, 128>}, {pipeline_mode = #tpu.pipeline_mode<synchronous>, transform_indices = @transform_3, window_bounds = array<i64: 128, 5>}, {pipeline_mode = #tpu.pipeline_mode<synchronous>, transform_indices = @transform_4, window_bounds = array<i64: 1, 5>}, {transform_indices = @transform_5, window_bounds = array<i64: 16, 5>}]} {
    %c0 = arith.constant 0 : index
    %c0_0 = arith.constant 0 : index
    %0 = vector.load %arg1[%c0, %c0_0] : memref<16x103xf32, #tpu.memory_space<vmem>>, vector<16x103xf32>
    %1 = arith.truncf %0 : vector<16x103xf32> to vector<16x103xbf16>
    %c0_1 = arith.constant 0 : index
    %c0_2 = arith.constant 0 : index
    %2 = vector.load %arg2[%c0_1, %c0_2] : memref<103x128xbf16, #tpu.memory_space<vmem>>, vector<103x128xbf16>
    %cst = arith.constant dense<0.000000e+00> : vector<16x128xf32>
    %3 = tpu.matmul %1, %2, %cst {dimension_numbers = #tpu.dot_dimension_numbers<[1], [0], [0], [1], [0, 0, 1, 1], [], []>} : vector<16x103xbf16>, vector<103x128xbf16>, vector<16x128xf32> -> vector<16x128xf32>
    %c0_3 = arith.constant 0 : index
    %c0_4 = arith.constant 0 : index
    %4 = vector.load %arg3[%c0_3, %c0_4] : memref<1x128xf32, #tpu.memory_space<vmem>>, vector<1x128xf32>
    %5 = vector.broadcast %4 : vector<1x128xf32> to vector<16x128xf32>
    %6 = arith.addf %3, %5 : vector<16x128xf32>
    %cst_5 = arith.constant 0.000000e+00 : f32
    %7 = vector.broadcast %cst_5 : f32 to vector<16x128xf32>
    %8 = arith.maximumf %6, %7 : vector<16x128xf32>
    %9 = arith.truncf %8 : vector<16x128xf32> to vector<16x128xbf16>
    %c0_6 = arith.constant 0 : index
    %c0_7 = arith.constant 0 : index
    %10 = vector.load %arg4[%c0_6, %c0_7] : memref<128x5xbf16, #tpu.memory_space<vmem>>, vector<128x5xbf16>
    %cst_8 = arith.constant dense<0.000000e+00> : vector<16x5xf32>
    %11 = tpu.matmul %9, %10, %cst_8 {dimension_numbers = #tpu.dot_dimension_numbers<[1], [0], [0], [1], [0, 0, 1, 1], [], []>} : vector<16x128xbf16>, vector<128x5xbf16>, vector<16x5xf32> -> vector<16x5xf32>
    %c0_9 = arith.constant 0 : index
    %c0_10 = arith.constant 0 : index
    %12 = vector.load %arg5[%c0_9, %c0_10] : memref<1x5xf32, #tpu.memory_space<vmem>>, vector<1x5xf32>
    %13 = vector.broadcast %12 : vector<1x5xf32> to vector<16x5xf32>
    %14 = arith.addf %11, %13 : vector<16x5xf32>
    %c0_11 = arith.constant 0 : index
    %c0_12 = arith.constant 0 : index
    %15 = vector.load %arg6[%c0_11, %c0_12] : memref<16x5xf32, #tpu.memory_space<vmem>>, vector<16x5xf32>
    tpu.vector_store %arg6[%c0_11, %c0_12], %14 {strides = array<i32>} : memref<16x5xf32, #tpu.memory_space<vmem>>, vector<16x5xf32>,
    return
  }
  func.func @transform_0(%arg0: i32) -> (i32, i32) {
    %c0_i32 = arith.constant 0 : i32
    %c0_i32_0 = arith.constant 0 : i32
    return %arg0, %c0_i32 : i32, i32
  }
  func.func @transform_1(%arg0: i32) -> (i32, i32) {
    %c0_i32 = arith.constant 0 : i32
    %c0_i32_0 = arith.constant 0 : i32
    %c0_i32_1 = arith.constant 0 : i32
    return %c0_i32, %c0_i32_0 : i32, i32
  }
  func.func @transform_2(%arg0: i32) -> (i32, i32) {
    %c0_i32 = arith.constant 0 : i32
    %c0_i32_0 = arith.constant 0 : i32
    %c0_i32_1 = arith.constant 0 : i32
    return %c0_i32, %c0_i32_0 : i32, i32
  }
  func.func @transform_3(%arg0: i32) -> (i32, i32) {
    %c0_i32 = arith.constant 0 : i32
    %c0_i32_0 = arith.constant 0 : i32
    %c0_i32_1 = arith.constant 0 : i32
    return %c0_i32, %c0_i32_0 : i32, i32
  }
  func.func @transform_4(%arg0: i32) -> (i32, i32) {
    %c0_i32 = arith.constant 0 : i32
    %c0_i32_0 = arith.constant 0 : i32
    %c0_i32_1 = arith.constant 0 : i32
    return %c0_i32, %c0_i32_0 : i32, i32
  }
  func.func @transform_5(%arg0: i32) -> (i32, i32) {
    %c0_i32 = arith.constant 0 : i32
    %c0_i32_0 = arith.constant 0 : i32
    return %arg0, %c0_i32 : i32, i32
  }
}

</mosaic_0001>

<llo_original>
// kernel: output_layer_status.1
$region0: #{output_layer_status.1}
  #allocation0 [shape = 'u32[]', space=smem, size = 0x4, offset = 0x4, fixed_abs, tag = 'smem constant byte address 0x4 - core index']
  #allocation1 [shape = 'u32[144,128]{1,0:T(1,128)}', space=vmem, size = 0x12000, scoped, tag = 'internal scratch']
  %s0 = inlined_call_operand.vmem [shape: f32[16,103], index: 0, kind: input, shape index: {}]
  %s1 = inlined_call_operand.vmem [shape: bf16[103,128], index: 1, kind: input, shape index: {}]
  %s2 = inlined_call_operand.vmem [shape: f32[1,128], index: 2, kind: input, shape index: {}]
  %s3 = inlined_call_operand.vmem [shape: bf16[128,5], index: 3, kind: input, shape index: {}]
  %s4 = inlined_call_operand.vmem [shape: f32[1,5], index: 4, kind: input, shape index: {}]
  %s5 = inlined_call_operand.vmem [shape: f32[16,5], index: 5, kind: output, shape index: {}]
  %s6 = sld [smem:[#allocation0]]
  $region30: #{output_layer_status.1} parent=0
    _
  %s8 = ssub.s32 1, %s6
  %s9 = scalar_select 0, %s8, %s6
  // Predicated region
  $region2: #{output_layer_status.1} parent=0 // pred_check
    _
  $region3: #{output_layer_status.1} parent=0 // pred_check_branch
    %11 = sbr.rel (0) target = $region5
  $region4: #{output_layer_status.1} parent=0 // pred_region
    _
  $region5: #{output_layer_status.1} parent=0 // pred_fallthru
    _
  // Predicated region
  $region6: #{output_layer_status.1} parent=0 // pred_check
    _
  $region7: #{output_layer_status.1} parent=0 // pred_check_branch
    %13 = sbr.rel (0) target = $region9
  $region8: #{output_layer_status.1} parent=0 // pred_region
    _
  $region9: #{output_layer_status.1} parent=0 // pred_fallthru
    _
  // Predicated region
  $region10: #{output_layer_status.1} parent=0 // pred_check
    _
  $region11: #{output_layer_status.1} parent=0 // pred_check_branch
    %15 = sbr.rel (0) target = $region13
  $region12: #{output_layer_status.1} parent=0 // pred_region
    _
  $region13: #{output_layer_status.1} parent=0 // pred_fallthru
    _
  // Predicated region
  $region14: #{output_layer_status.1} parent=0 // pred_check
    _
  $region15: #{output_layer_status.1} parent=0 // pred_check_branch
    %17 = sbr.rel (0) target = $region17
  $region16: #{output_layer_status.1} parent=0 // pred_region
    _
  $region17: #{output_layer_status.1} parent=0 // pred_fallthru
    _
  // Predicated region
  $region18: #{output_layer_status.1} parent=0 // pred_check
    _
  $region19: #{output_layer_status.1} parent=0 // pred_check_branch
    %19 = sbr.rel (0) target = $region21
  $region20: #{output_layer_status.1} parent=0 // pred_region
    _
  $region21: #{output_layer_status.1} parent=0 // pred_fallthru
    _
  %v21 = vld [vmem:[%s0] sm:$0xff]
  %v22 = vld [vmem:[%s0 + $0x8] sm:$0xff]
  %v23 = vpack.c.bf16 %v22, %v21
  %v24 = vld [vmem:[%s1] sm:$0xf]
  %v25 = vld [vmem:[%s1 + $0x4] sm:$0xf]
  %v26 = vld [vmem:[%s1 + $0x8] sm:$0xf]
  %v27 = vld [vmem:[%s1 + $0xc] sm:$0xf]
  %v28 = vld [vmem:[%s1 + $0x10] sm:$0xf]
  %v29 = vld [vmem:[%s1 + $0x14] sm:$0xf]
  %v30 = vld [vmem:[%s1 + $0x18] sm:$0xf]
  %v31 = vld [vmem:[%s1 + $0x1c] sm:$0xf]
  %v32 = vld [vmem:[%s1 + $0x20] sm:$0xf]
  %v33 = vld [vmem:[%s1 + $0x24] sm:$0xf]
  %v34 = vld [vmem:[%s1 + $0x28] sm:$0xf]
  %v35 = vld [vmem:[%s1 + $0x2c] sm:$0xf]
  %v36 = vld [vmem:[%s1 + $0x30] sm:$0xf]
  %v37 = vld [vmem:[%s2] sm:$0x1]
  %v39 = vlaneseq
  %v40 = vshrl.u32 %v39, 7
  %v41 = vsub.s32 0, %v40
  %v42 = vrot.slane %v37, %v41
  %v57 = vunpack.c.l.b16 %v24
  %v58 = vunpack.c.l.b16 %v25
  %v59 = vunpack.c.l.b16 %v26
  %v60 = vunpack.c.l.b16 %v27
  %v61 = vunpack.c.l.b16 %v28
  %v62 = vunpack.c.l.b16 %v29
  %v63 = vunpack.c.l.b16 %v30
  %v64 = vunpack.c.l.b16 %v31
  %v65 = vunpack.c.l.b16 %v32
  %v66 = vunpack.c.l.b16 %v33
  %v67 = vunpack.c.l.b16 %v34
  %v68 = vunpack.c.l.b16 %v35
  %v69 = vunpack.c.l.b16 %v36
  %v70 = vpack.c.b16 %v58, %v57
  %v71 = vpack.c.b16 %v60, %v59
  %v72 = vpack.c.b16 %v62, %v61
  %v73 = vpack.c.b16 %v64, %v63
  %v74 = vpack.c.b16 %v66, %v65
  %v75 = vpack.c.b16 %v68, %v67
  %v76 = vpack.c.b16 %v69, %v69
  %vm83 = vcmask 842752
  %v85 = vsel %vm83, %v23, 0
  %vm87 = vcmask 1042432
  %vm88 = vcmask 1043456
  %v89 = vsel %vm87, 4294967295, 65535
  %v90 = vsel %vm88, %v89, 0
  %v92 = vand.u32 %v76, %v90
  %94 = vmatprep.subr.bf16.mxu0 0
  %95 = vmatpush1.bf16.msra.mxu0 0
  %96 = vmatprep.subr.bf16.mxu0 0
  %97 = vmatpush1.bf16.msra.mxu0 %v92
  %98 = vmatprep.subr.bf16.mxu0 0
  %99 = vmatpush1.bf16.msra.mxu0 %v75
  %100 = vmatprep.subr.bf16.mxu0 0
  %101 = vmatpush1.bf16.msra.mxu0 %v74
  %102 = vmatprep.subr.bf16.mxu0 0
  %103 = vmatpush1.bf16.msra.mxu0 %v73
  %104 = vmatprep.subr.bf16.mxu0 0
  %105 = vmatpush1.bf16.msra.mxu0 %v72
  %106 = vmatprep.subr.bf16.mxu0 0
  %107 = vmatpush1.bf16.msra.mxu0 %v71
  %108 = vmatprep.subr.bf16.mxu0 0
  %109 = vmatpush1.bf16.msra.mxu0 %v70
  %110 = vmatprep.subr.bf16.mxu0 0
  %111 = vmatpush2.bf16.msra.mxu0 0
  %112 = vmatprep.subr.bf16.mxu0 0
  %113 = vmatpush2.bf16.msra.mxu0 0
  %114 = vmatprep.subr.bf16.mxu0 0
  %115 = vmatpush2.bf16.msra.mxu0 0
  %116 = vmatprep.subr.bf16.mxu0 0
  %117 = vmatpush2.bf16.msra.mxu0 0
  %118 = vmatprep.subr.bf16.mxu0 0
  %119 = vmatpush2.bf16.msra.mxu0 0
  %120 = vmatprep.subr.bf16.mxu0 0
  %121 = vmatpush2.bf16.msra.mxu0 0
  %122 = vmatprep.subr.bf16.mxu0 0
  %123 = vmatpush2.bf16.msra.mxu0 0
  %124 = vmatprep.subr.bf16.mxu0 0
  %125 = vmatpush2.bf16.msra.mxu0 0
  %126 = vmatprep.mubr.bf16.mxu0 0
  %127 = vmatmul.mubr.bf16.gmra.mxu0 %v85
  %v128 = vpop.f32.mrf.mxu0
  %v129 = vadd.f32 %v42, %v128
  %v130 = vpop.f32.mrf.mxu0
  %v131 = vpop.f32.mrf.mxu0
  %v132 = vadd.f32 %v42, %v131
  %v133 = vpop.f32.mrf.mxu0
  %134 = vdwg.mxu0
  %v135 = vmax.f32 %v129, 0.0
  %v136 = vmax.f32 %v132, 0.0
  %v137 = vpack.c.bf16 %v136, %v135
  %v138 = vld [vmem:[%s3] sm:$0xf]
  %v139 = vld [vmem:[%s3 + $0x4] sm:$0xf]
  %v140 = vld [vmem:[%s3 + $0x8] sm:$0xf]
  %v141 = vld [vmem:[%s3 + $0xc] sm:$0xf]
  %v142 = vld [vmem:[%s3 + $0x10] sm:$0xf]
  %v143 = vld [vmem:[%s3 + $0x14] sm:$0xf]
  %v144 = vld [vmem:[%s3 + $0x18] sm:$0xf]
  %v145 = vld [vmem:[%s3 + $0x1c] sm:$0xf]
  %v146 = vld [vmem:[%s3 + $0x20] sm:$0xf]
  %v147 = vld [vmem:[%s3 + $0x24] sm:$0xf]
  %v148 = vld [vmem:[%s3 + $0x28] sm:$0xf]
  %v149 = vld [vmem:[%s3 + $0x2c] sm:$0xf]
  %v150 = vld [vmem:[%s3 + $0x30] sm:$0xf]
  %v151 = vld [vmem:[%s3 + $0x34] sm:$0xf]
  %v152 = vld [vmem:[%s3 + $0x38] sm:$0xf]
  %v153 = vld [vmem:[%s3 + $0x3c] sm:$0xf]
  %v154 = vld [vmem:[%s4] sm:$0x1]
  %v156 = vlaneseq
  %v157 = vshrl.u32 %v156, 7
  %v158 = vsub.s32 0, %v157
  %v159 = vrot.slane %v154, %v158
  %v177 = vunpack.c.l.b16 %v138
  %v178 = vunpack.c.l.b16 %v139
  %v179 = vunpack.c.l.b16 %v140
  %v180 = vunpack.c.l.b16 %v141
  %v181 = vunpack.c.l.b16 %v142
  %v182 = vunpack.c.l.b16 %v143
  %v183 = vunpack.c.l.b16 %v144
  %v184 = vunpack.c.l.b16 %v145
  %v185 = vunpack.c.l.b16 %v146
  %v186 = vunpack.c.l.b16 %v147
  %v187 = vunpack.c.l.b16 %v148
  %v188 = vunpack.c.l.b16 %v149
  %v189 = vunpack.c.l.b16 %v150
  %v190 = vunpack.c.l.b16 %v151
  %v191 = vunpack.c.l.b16 %v152
  %v192 = vunpack.c.l.b16 %v153
  %v193 = vpack.c.b16 %v178, %v177
  %v194 = vpack.c.b16 %v180, %v179
  %v195 = vpack.c.b16 %v182, %v181
  %v196 = vpack.c.b16 %v184, %v183
  %v197 = vpack.c.b16 %v186, %v185
  %v198 = vpack.c.b16 %v188, %v187
  %v199 = vpack.c.b16 %v190, %v189
  %v200 = vpack.c.b16 %v192, %v191
  %209 = vmatprep.subr.bf16.mxu0 0
  %210 = vmatpush1.bf16.msra.mxu0 %v200
  %211 = vmatprep.subr.bf16.mxu0 0
  %212 = vmatpush1.bf16.msra.mxu0 %v199
  %213 = vmatprep.subr.bf16.mxu0 0
  %214 = vmatpush1.bf16.msra.mxu0 %v198
  %215 = vmatprep.subr.bf16.mxu0 0
  %216 = vmatpush1.bf16.msra.mxu0 %v197
  %217 = vmatprep.subr.bf16.mxu0 0
  %218 = vmatpush1.bf16.msra.mxu0 %v196
  %219 = vmatprep.subr.bf16.mxu0 0
  %220 = vmatpush1.bf16.msra.mxu0 %v195
  %221 = vmatprep.subr.bf16.mxu0 0
  %222 = vmatpush1.bf16.msra.mxu0 %v194
  %223 = vmatprep.subr.bf16.mxu0 0
  %224 = vmatpush1.bf16.msra.mxu0 %v193
  %225 = vmatprep.subr.bf16.mxu0 0
  %226 = vmatpush2.bf16.msra.mxu0 0
  %227 = vmatprep.subr.bf16.mxu0 0
  %228 = vmatpush2.bf16.msra.mxu0 0
  %229 = vmatprep.subr.bf16.mxu0 0
  %230 = vmatpush2.bf16.msra.mxu0 0
  %231 = vmatprep.subr.bf16.mxu0 0
  %232 = vmatpush2.bf16.msra.mxu0 0
  %233 = vmatprep.subr.bf16.mxu0 0
  %234 = vmatpush2.bf16.msra.mxu0 0
  %235 = vmatprep.subr.bf16.mxu0 0
  %236 = vmatpush2.bf16.msra.mxu0 0
  %237 = vmatprep.subr.bf16.mxu0 0
  %238 = vmatpush2.bf16.msra.mxu0 0
  %239 = vmatprep.subr.bf16.mxu0 0
  %240 = vmatpush2.bf16.msra.mxu0 0
  %241 = vmatprep.mubr.bf16.mxu0 0
  %242 = vmatmul.mubr.bf16.gmra.mxu0 %v137
  %v243 = vpop.f32.mrf.mxu0
  %v244 = vadd.f32 %v159, %v243
  %v245 = vpop.f32.mrf.mxu0
  %v246 = vpop.f32.mrf.mxu0
  %v247 = vadd.f32 %v159, %v246
  %v248 = vpop.f32.mrf.mxu0
  %249 = vdwg.mxu0
  %vm250 = vcmask 39936
  %251 = vst.msk [vmem:[%s5] sm:$0xff] %vm250, %v244
  %252 = vst.msk [vmem:[%s5 + $0x8] sm:$0xff] %vm250, %v247
  // Predicated region
  $region22: #{output_layer_status.1} parent=0 // pred_check
    _
  $region23: #{output_layer_status.1} parent=0 // pred_check_branch
    %254 = sbr.rel (0) target = $region25
  $region24: #{output_layer_status.1} parent=0 // pred_region
    _
  $region25: #{output_layer_status.1} parent=0 // pred_fallthru
    _
  // Predicated region
  $region26: #{output_layer_status.1} parent=0 // pred_check
    _
  $region27: #{output_layer_status.1} parent=0 // pred_check_branch
    %256 = sbr.rel (0) target = $region29
  $region28: #{output_layer_status.1} parent=0 // pred_region
    _
  $region29: #{output_layer_status.1} parent=0 // pred_fallthru
    _

</llo_original>
